<compile_context>
chip_gen: v6e
topology: v6e:2x2x1
jax: 0.10.0
libtpu: 0.0.40
codegen_flags: <defaults>
</compile_context>

<pallas_src>
import math

import jax
import jax.numpy as jnp
from jax.experimental import pallas as pl
from jax.experimental.pallas import tpu as pltpu


def _stacked_lstm_kernel(x_ref, hprev_ref, cprev_ref, wih_ref, whh_ref, b_ref,
                         h_out_ref, c_out_ref, inp_scratch):
    """One grid step == one LSTM layer of the stack (single time step)."""
    layer = pl.program_id(0)
    H = h_out_ref.shape[-1]
    w_dtype = wih_ref.dtype

    # Layer 0: the (padded) external input x feeds the cell.
    @pl.when(layer == 0)
    def _():
        inp_scratch[...] = x_ref[...].astype(inp_scratch.dtype)

    inp = inp_scratch[...].astype(w_dtype)          # (B, in_max)
    h_prev = hprev_ref[0].astype(w_dtype)           # (B, H)
    c_prev = cprev_ref[0].astype(jnp.float32)       # (B, H)

    # Fused gates: one (B,in_max)@(in_max,4H) + one (B,H)@(H,4H) matmul,
    # fp32 accumulation, single pre-summed bias. 4H is lane-dense (>=128).
    gates = (jnp.dot(inp, wih_ref[0], preferred_element_type=jnp.float32)
             + jnp.dot(h_prev, whh_ref[0], preferred_element_type=jnp.float32)
             + b_ref[0].astype(jnp.float32))        # (B, 4H)

    # torch.nn.LSTMCell gate order: i, f, g, o
    i_g = jax.nn.sigmoid(gates[:, 0 * H:1 * H])
    f_g = jax.nn.sigmoid(gates[:, 1 * H:2 * H])
    g_g = jnp.tanh(gates[:, 2 * H:3 * H])
    o_g = jax.nn.sigmoid(gates[:, 3 * H:4 * H])

    c_new = f_g * c_prev + i_g * g_g
    h_new = o_g * jnp.tanh(c_new)

    h_out_ref[0] = h_new.astype(h_out_ref.dtype)
    c_out_ref[0] = c_new.astype(c_out_ref.dtype)

    # Carry h to the next layer. Only the first H columns are written; any
    # stale data in columns [H:in_max] multiplies zero-padded weight rows of
    # the next layer's W_ih, so no explicit zeroing is needed.
    @pl.when(layer + 1 < pl.num_programs(0))
    def _():
        inp_scratch[:, 0:H] = h_new.astype(inp_scratch.dtype)


class BaseCellPallas:
    """JAX/Pallas equivalent of vedastr BaseCell(basic_cell=nn.LSTMCell)."""

    def __init__(self, input_size, hidden_size, bias=True, num_layers=1,
                 key=jax.random.PRNGKey(0), param_dtype=jnp.float32):
        self.input_size = input_size
        self.hidden_size = hidden_size
        self.bias = bias
        self.num_layers = num_layers
        self.in_max = max(input_size, hidden_size)
        self.param_dtype = param_dtype

        H = hidden_size
        stdv = 1.0 / math.sqrt(H)
        wih_list, whh_list, b_list = [], [], []
        for i in range(num_layers):
            in_sz = input_size if i == 0 else hidden_size
            key, k1, k2, k3, k4 = jax.random.split(key, 5)
            # Stored pre-transposed, gates concatenated along the last dim
            # (order i,f,g,o) so the kernel does a single x @ W per operand.
            w_ih = jax.random.uniform(k1, (in_sz, 4 * H), jnp.float32,
                                      minval=-stdv, maxval=stdv)
            w_hh = jax.random.uniform(k2, (H, 4 * H), jnp.float32,
                                      minval=-stdv, maxval=stdv)
            if bias:
                b_ih = jax.random.uniform(k3, (4 * H,), jnp.float32,
                                          minval=-stdv, maxval=stdv)
                b_hh = jax.random.uniform(k4, (4 * H,), jnp.float32,
                                          minval=-stdv, maxval=stdv)
            else:
                b_ih = jnp.zeros((4 * H,), jnp.float32)
                b_hh = jnp.zeros((4 * H,), jnp.float32)
            b = (b_ih + b_hh)[None, :]                      # pre-summed bias
            if in_sz < self.in_max:                         # zero-row pad
                w_ih = jnp.pad(w_ih, ((0, self.in_max - in_sz), (0, 0)))
            wih_list.append(w_ih)
            whh_list.append(w_hh)
            b_list.append(b)

        self.w_ih = jnp.stack(wih_list).astype(param_dtype)   # (L, in_max, 4H)
        self.w_hh = jnp.stack(whh_list).astype(param_dtype)   # (L, H, 4H)
        self.b = jnp.stack(b_list).astype(param_dtype)        # (L, 1, 4H)

    # LSTM: hidden is the (h, c) tuple; h feeds the next layer / output.
    def get_hidden_state(self, hidden):
        return hidden[0]

    def init_hidden(self, batch_size, dtype=jnp.float32, value=0.0):
        return [(jnp.full((batch_size, self.hidden_size), value, dtype),
                 jnp.full((batch_size, self.hidden_size), value, dtype))
                for _ in range(self.num_layers)]

    def forward(self, x, pre_hiddens):
        B = x.shape[0]
        H = self.hidden_size
        L = self.num_layers
        in_max = self.in_max

        if x.shape[1] < in_max:
            x = jnp.pad(x, ((0, 0), (0, in_max - x.shape[1])))

        h_stack = jnp.stack([h for (h, _) in pre_hiddens])   # (L, B, H)
        c_stack = jnp.stack([c for (_, c) in pre_hiddens])   # (L, B, H)

        grid_spec = pltpu.PrefetchScalarGridSpec(
            num_scalar_prefetch=0,
            grid=(L,),
            in_specs=[
                pl.BlockSpec((B, in_max), lambda i: (0, 0)),          # x (resident)
                pl.BlockSpec((1, B, H), lambda i: (i, 0, 0)),         # h_prev[i]
                pl.BlockSpec((1, B, H), lambda i: (i, 0, 0)),         # c_prev[i]
                pl.BlockSpec((1, in_max, 4 * H), lambda i: (i, 0, 0)),  # W_ih[i]
                pl.BlockSpec((1, H, 4 * H), lambda i: (i, 0, 0)),     # W_hh[i]
                pl.BlockSpec((1, 1, 4 * H), lambda i: (i, 0, 0)),     # bias[i]
            ],
            out_specs=(
                pl.BlockSpec((1, B, H), lambda i: (i, 0, 0)),         # h_out[i]
                pl.BlockSpec((1, B, H), lambda i: (i, 0, 0)),         # c_out[i]
            ),
            scratch_shapes=[pltpu.VMEM((B, in_max), jnp.float32)],    # layer carry
        )

        h_out, c_out = pl.pallas_call(
            _stacked_lstm_kernel,
            out_shape=(jax.ShapeDtypeStruct((L, B, H), x.dtype),
                       jax.ShapeDtypeStruct((L, B, H), x.dtype)),
            grid_spec=grid_spec,
            compiler_params=pltpu.CompilerParams(
                dimension_semantics=("arbitrary",)),   # layers are sequential
        )(x, h_stack, c_stack, self.w_ih, self.w_hh, self.b)

        return [(h_out[i], c_out[i]) for i in range(L)]

    __call__ = forward


def _reference_forward(cell, x, pre_hiddens):
    """Pure-JAX reference of the same math (for a sanity check)."""
    H = cell.hidden_size
    outs = []
    inp = x
    for i in range(cell.num_layers):
        in_sz = cell.input_size if i == 0 else H
        w_ih = cell.w_ih[i, :in_sz].astype(jnp.float32)   # (in_sz, 4H)
        w_hh = cell.w_hh[i].astype(jnp.float32)           # (H, 4H)
        b = cell.b[i, 0].astype(jnp.float32)              # (4H,)
        h, c = pre_hiddens[i]
        gates = inp @ w_ih + h @ w_hh + b
        i_g = jax.nn.sigmoid(gates[:, 0 * H:1 * H])
        f_g = jax.nn.sigmoid(gates[:, 1 * H:2 * H])
        g_g = jnp.tanh(gates[:, 2 * H:3 * H])
        o_g = jax.nn.sigmoid(gates[:, 3 * H:4 * H])
        c_new = f_g * c + i_g * g_g
        h_new = o_g * jnp.tanh(c_new)
        outs.append((h_new, c_new))
        inp = h_new
    return outs


if __name__ == "__main__":
    B, D, H, L = 8, 64, 32, 3
    key = jax.random.PRNGKey(0)
    k_x, k_h, k_p = jax.random.split(key, 3)

    x = jax.random.normal(k_x, (B, D), jnp.float32)
    pre_hiddens = []
    for _ in range(L):
        k_h, kh1, kh2 = jax.random.split(k_h, 3)
        pre_hiddens.append((jax.random.normal(kh1, (B, H), jnp.float32),
                            jax.random.normal(kh2, (B, H), jnp.float32)))

    cell = BaseCellPallas(input_size=D, hidden_size=H, bias=True,
                          num_layers=L, key=k_p)

    next_hiddens = cell(x, pre_hiddens)
    next_hiddens = jax.block_until_ready(next_hiddens)

    ref = _reference_forward(cell, x, pre_hiddens)
    for (h_k, c_k), (h_r, c_r) in zip(next_hiddens, ref):
        assert jnp.allclose(h_k, h_r, atol=1e-5, rtol=1e-5)
        assert jnp.allclose(c_k, c_r, atol=1e-5, rtol=1e-5)

    print("KERNEL_OK")
</pallas_src>

<mosaic_0001>
module attributes {stable_mosaic.version = 11 : i64} {
  func.func @_stacked_lstm_kernel(%arg0: i32, %arg1: memref<8x64xf32, #tpu.memory_space<vmem>>, %arg2: memref<1x8x32xf32, #tpu.memory_space<vmem>>, %arg3: memref<1x8x32xf32, #tpu.memory_space<vmem>>, %arg4: memref<1x64x128xf32, #tpu.memory_space<vmem>>, %arg5: memref<1x32x128xf32, #tpu.memory_space<vmem>>, %arg6: memref<1x1x128xf32, #tpu.memory_space<vmem>>, %arg7: memref<1x8x32xf32, #tpu.memory_space<vmem>>, %arg8: memref<1x8x32xf32, #tpu.memory_space<vmem>>, %arg9: memref<8x64xf32, #tpu.memory_space<vmem>>) attributes {dimension_semantics = [#tpu.dimension_semantics<arbitrary>], iteration_bounds = array<i64: 3>, scalar_prefetch = 0 : i64, scratch_operands = 1 : i64, tpu.core_type = #tpu.core_type<tc>, window_params = [{pipeline_mode = #tpu.pipeline_mode<synchronous>, transform_indices = @transform_0, window_bounds = array<i64: 8, 64>}, {transform_indices = @transform_1, window_bounds = array<i64: 1, 8, 32>}, {transform_indices = @transform_2, window_bounds = array<i64: 1, 8, 32>}, {transform_indices = @transform_3, window_bounds = array<i64: 1, 64, 128>}, {transform_indices = @transform_4, window_bounds = array<i64: 1, 32, 128>}, {transform_indices = @transform_5, window_bounds = array<i64: 1, 1, 128>}, {transform_indices = @transform_6, window_bounds = array<i64: 1, 8, 32>}, {transform_indices = @transform_7, window_bounds = array<i64: 1, 8, 32>}]} {
    %c0_i32 = arith.constant 0 : i32
    %0 = arith.cmpi eq, %arg0, %c0_i32 : i32
    %1 = arith.extui %0 : i1 to i32
    %c0_i32_0 = arith.constant 0 : i32
    %2 = arith.cmpi ne, %1, %c0_i32_0 : i32
    scf.if %2 {
      %c0_28 = arith.constant 0 : index
      %c0_29 = arith.constant 0 : index
      %54 = vector.load %arg1[%c0_28, %c0_29] : memref<8x64xf32, #tpu.memory_space<vmem>>, vector<8x64xf32>
      %c0_30 = arith.constant 0 : index
      %c0_31 = arith.constant 0 : index
      %55 = vector.load %arg9[%c0_30, %c0_31] : memref<8x64xf32, #tpu.memory_space<vmem>>, vector<8x64xf32>
      tpu.vector_store %arg9[%c0_30, %c0_31], %54 {strides = array<i32>} : memref<8x64xf32, #tpu.memory_space<vmem>>, vector<8x64xf32>,
    } else {
    }
    %c0 = arith.constant 0 : index
    %c0_1 = arith.constant 0 : index
    %3 = vector.load %arg9[%c0, %c0_1] : memref<8x64xf32, #tpu.memory_space<vmem>>, vector<8x64xf32>
    %c0_2 = arith.constant 0 : index
    %c0_3 = arith.constant 0 : index
    %c0_4 = arith.constant 0 : index
    %4 = vector.load %arg2[%c0_2, %c0_3, %c0_4] : memref<1x8x32xf32, #tpu.memory_space<vmem>>, vector<1x8x32xf32>
    %5 = vector.shape_cast %4 : vector<1x8x32xf32> to vector<8x32xf32>
    %c0_5 = arith.constant 0 : index
    %c0_6 = arith.constant 0 : index
    %c0_7 = arith.constant 0 : index
    %6 = vector.load %arg3[%c0_5, %c0_6, %c0_7] : memref<1x8x32xf32, #tpu.memory_space<vmem>>, vector<1x8x32xf32>
    %7 = vector.shape_cast %6 : vector<1x8x32xf32> to vector<8x32xf32>
    %c0_8 = arith.constant 0 : index
    %c0_9 = arith.constant 0 : index
    %c0_10 = arith.constant 0 : index
    %8 = vector.load %arg4[%c0_8, %c0_9, %c0_10] : memref<1x64x128xf32, #tpu.memory_space<vmem>>, vector<1x64x128xf32>
    %9 = vector.shape_cast %8 : vector<1x64x128xf32> to vector<64x128xf32>
    %cst = arith.constant dense<0.000000e+00> : vector<8x128xf32>
    %10 = tpu.matmul %3, %9, %cst {dimension_numbers = #tpu.dot_dimension_numbers<[1], [0], [0], [1], [0, 0, 1, 1], [], []>} : vector<8x64xf32>, vector<64x128xf32>, vector<8x128xf32> -> vector<8x128xf32>
    %c0_11 = arith.constant 0 : index
    %c0_12 = arith.constant 0 : index
    %c0_13 = arith.constant 0 : index
    %11 = vector.load %arg5[%c0_11, %c0_12, %c0_13] : memref<1x32x128xf32, #tpu.memory_space<vmem>>, vector<1x32x128xf32>
    %12 = vector.shape_cast %11 : vector<1x32x128xf32> to vector<32x128xf32>
    %cst_14 = arith.constant dense<0.000000e+00> : vector<8x128xf32>
    %13 = tpu.matmul %5, %12, %cst_14 {dimension_numbers = #tpu.dot_dimension_numbers<[1], [0], [0], [1], [0, 0, 1, 1], [], []>} : vector<8x32xf32>, vector<32x128xf32>, vector<8x128xf32> -> vector<8x128xf32>
    %14 = arith.addf %10, %13 : vector<8x128xf32>
    %c0_15 = arith.constant 0 : index
    %c0_16 = arith.constant 0 : index
    %c0_17 = arith.constant 0 : index
    %15 = vector.load %arg6[%c0_15, %c0_16, %c0_17] : memref<1x1x128xf32, #tpu.memory_space<vmem>>, vector<1x1x128xf32>
    %16 = vector.shape_cast %15 : vector<1x1x128xf32> to vector<1x128xf32>
    %17 = vector.broadcast %16 : vector<1x128xf32> to vector<8x128xf32>
    %18 = arith.addf %14, %17 : vector<8x128xf32>
    %19 = vector.extract_strided_slice %18 {offsets = [0, 0], sizes = [8, 32], strides = [1, 1]} : vector<8x128xf32> to vector<8x32xf32>
    %20 = arith.negf %19 : vector<8x32xf32>
    %21 = math.exp %20 : vector<8x32xf32>
    %cst_18 = arith.constant 1.000000e+00 : f32
    %22 = vector.broadcast %cst_18 : f32 to vector<8x32xf32>
    %23 = arith.addf %22, %21 : vector<8x32xf32>
    %24 = arith.divf %22, %23 : vector<8x32xf32>
    %25 = vector.extract_strided_slice %18 {offsets = [0, 32], sizes = [8, 32], strides = [1, 1]} : vector<8x128xf32> to vector<8x32xf32>
    %26 = arith.negf %25 : vector<8x32xf32>
    %27 = math.exp %26 : vector<8x32xf32>
    %cst_19 = arith.constant 1.000000e+00 : f32
    %28 = vector.broadcast %cst_19 : f32 to vector<8x32xf32>
    %29 = arith.addf %28, %27 : vector<8x32xf32>
    %30 = arith.divf %28, %29 : vector<8x32xf32>
    %31 = vector.extract_strided_slice %18 {offsets = [0, 64], sizes = [8, 32], strides = [1, 1]} : vector<8x128xf32> to vector<8x32xf32>
    %32 = math.tanh %31 : vector<8x32xf32>
    %33 = vector.extract_strided_slice %18 {offsets = [0, 96], sizes = [8, 32], strides = [1, 1]} : vector<8x128xf32> to vector<8x32xf32>
    %34 = arith.negf %33 : vector<8x32xf32>
    %35 = math.exp %34 : vector<8x32xf32>
    %cst_20 = arith.constant 1.000000e+00 : f32
    %36 = vector.broadcast %cst_20 : f32 to vector<8x32xf32>
    %37 = arith.addf %36, %35 : vector<8x32xf32>
    %38 = arith.divf %36, %37 : vector<8x32xf32>
    %39 = arith.mulf %30, %7 : vector<8x32xf32>
    %40 = arith.mulf %24, %32 : vector<8x32xf32>
    %41 = arith.addf %39, %40 : vector<8x32xf32>
    %42 = math.tanh %41 : vector<8x32xf32>
    %43 = arith.mulf %38, %42 : vector<8x32xf32>
    %c0_21 = arith.constant 0 : index
    %c0_22 = arith.constant 0 : index
    %c0_23 = arith.constant 0 : index
    %44 = vector.load %arg7[%c0_21, %c0_22, %c0_23] : memref<1x8x32xf32, #tpu.memory_space<vmem>>, vector<1x8x32xf32>
    %45 = vector.shape_cast %44 : vector<1x8x32xf32> to vector<8x32xf32>
    %46 = vector.shape_cast %43 : vector<8x32xf32> to vector<1x8x32xf32>
    tpu.vector_store %arg7[%c0_21, %c0_22, %c0_23], %46 {strides = array<i32>} : memref<1x8x32xf32, #tpu.memory_space<vmem>>, vector<1x8x32xf32>,
    %c0_24 = arith.constant 0 : index
    %c0_25 = arith.constant 0 : index
    %c0_26 = arith.constant 0 : index
    %47 = vector.load %arg8[%c0_24, %c0_25, %c0_26] : memref<1x8x32xf32, #tpu.memory_space<vmem>>, vector<1x8x32xf32>
    %48 = vector.shape_cast %47 : vector<1x8x32xf32> to vector<8x32xf32>
    %49 = vector.shape_cast %41 : vector<8x32xf32> to vector<1x8x32xf32>
    tpu.vector_store %arg8[%c0_24, %c0_25, %c0_26], %49 {strides = array<i32>} : memref<1x8x32xf32, #tpu.memory_space<vmem>>, vector<1x8x32xf32>,
    %c1_i32 = arith.constant 1 : i32
    %50 = arith.addi %arg0, %c1_i32 : i32
    %c3_i32 = arith.constant 3 : i32
    %51 = arith.cmpi slt, %50, %c3_i32 : i32
    %52 = arith.extui %51 : i1 to i32
    %c0_i32_27 = arith.constant 0 : i32
    %53 = arith.cmpi ne, %52, %c0_i32_27 : i32
    scf.if %53 {
      %c0_28 = arith.constant 0 : index
      %c0_29 = arith.constant 0 : index
      %54 = vector.load %arg9[%c0_28, %c0_29] : memref<8x64xf32, #tpu.memory_space<vmem>>, vector<8x32xf32>
      tpu.vector_store %arg9[%c0_28, %c0_29], %43 {strides = array<i32>} : memref<8x64xf32, #tpu.memory_space<vmem>>, vector<8x32xf32>,
    } else {
    }
    return
  }
  func.func @transform_0(%arg0: i32) -> (i32, i32) {
    %c0_i32 = arith.constant 0 : i32
    %c0_i32_0 = arith.constant 0 : i32
    %c0_i32_1 = arith.constant 0 : i32
    return %c0_i32, %c0_i32_0 : i32, i32
  }
  func.func @transform_1(%arg0: i32) -> (i32, i32, i32) {
    %c0_i32 = arith.constant 0 : i32
    %c0_i32_0 = arith.constant 0 : i32
    %c0_i32_1 = arith.constant 0 : i32
    return %arg0, %c0_i32, %c0_i32_0 : i32, i32, i32
  }
  func.func @transform_2(%arg0: i32) -> (i32, i32, i32) {
    %c0_i32 = arith.constant 0 : i32
    %c0_i32_0 = arith.constant 0 : i32
    %c0_i32_1 = arith.constant 0 : i32
    return %arg0, %c0_i32, %c0_i32_0 : i32, i32, i32
  }
  func.func @transform_3(%arg0: i32) -> (i32, i32, i32) {
    %c0_i32 = arith.constant 0 : i32
    %c0_i32_0 = arith.constant 0 : i32
    %c0_i32_1 = arith.constant 0 : i32
    return %arg0, %c0_i32, %c0_i32_0 : i32, i32, i32
  }
  func.func @transform_4(%arg0: i32) -> (i32, i32, i32) {
    %c0_i32 = arith.constant 0 : i32
    %c0_i32_0 = arith.constant 0 : i32
    %c0_i32_1 = arith.constant 0 : i32
    return %arg0, %c0_i32, %c0_i32_0 : i32, i32, i32
  }
  func.func @transform_5(%arg0: i32) -> (i32, i32, i32) {
    %c0_i32 = arith.constant 0 : i32
    %c0_i32_0 = arith.constant 0 : i32
    %c0_i32_1 = arith.constant 0 : i32
    return %arg0, %c0_i32, %c0_i32_0 : i32, i32, i32
  }
  func.func @transform_6(%arg0: i32) -> (i32, i32, i32) {
    %c0_i32 = arith.constant 0 : i32
    %c0_i32_0 = arith.constant 0 : i32
    %c0_i32_1 = arith.constant 0 : i32
    return %arg0, %c0_i32, %c0_i32_0 : i32, i32, i32
  }
  func.func @transform_7(%arg0: i32) -> (i32, i32, i32) {
    %c0_i32 = arith.constant 0 : i32
    %c0_i32_0 = arith.constant 0 : i32
    %c0_i32_1 = arith.constant 0 : i32
    return %arg0, %c0_i32, %c0_i32_0 : i32, i32, i32
  }
}

</mosaic_0001>

<llo_original>
// kernel: tpu_custom_call.1
$region0: #{tpu_custom_call.1}
  #allocation0 [shape = 'u32[]', space=smem, size = 0x4, offset = 0x4, fixed_abs, tag = 'smem constant byte address 0x4 - core index']
  #allocation1 [shape = 'u32[144,128]{1,0:T(1,128)}', space=vmem, size = 0x12000, scoped, tag = 'internal scratch']
  #allocation2 [shape = 'f32[8,64]{1,0:T(8,128)}', space=vmem, size = 0x1000, scoped, tag = 'scratch operand']
  %s0 = inlined_call_operand.hbm [shape: f32[8,64], index: 0, kind: input, shape index: {}]
  %s1 = inlined_call_operand.hbm [shape: f32[3,8,32], index: 1, kind: input, shape index: {}]
  %s2 = inlined_call_operand.hbm [shape: f32[3,8,32], index: 2, kind: input, shape index: {}]
  %s3 = inlined_call_operand.hbm [shape: f32[3,64,128], index: 3, kind: input, shape index: {}]
  %s4 = inlined_call_operand.hbm [shape: f32[3,32,128], index: 4, kind: input, shape index: {}]
  %s5 = inlined_call_operand.vmem [shape: f32[3,1,128], index: 5, kind: input, shape index: {}]
  %s6 = inlined_call_operand.hbm [shape: f32[3,8,32], index: 6, kind: output, shape index: {0}]
  %s7 = inlined_call_operand.hbm [shape: f32[3,8,32], index: 7, kind: output, shape index: {1}]
  %8 = xla_tuple %s6, %s7
  %s9 = sld [smem:[#allocation0]]
  $region93: #{tpu_custom_call.1} parent=0
    _
  %s11 = ssub.s32 1, %s9
  %s12 = scalar_select 0, %s11, %s9
  $region1: #{tpu_custom_call.1} parent=0
    #allocation3 [shape = 'u8[4096]{0}', space=vmem, size = 0x1000, scoped, tag = 'input window, operand 0, single buffered']
    #allocation4 [shape = 's32[2]{0}', space=sflag, size = 0x8, scoped, tag = 'scoped memory for tpu_custom_call.1']
    #allocation5 [shape = 's32[2]{0}', space=sflag, size = 0x8, scoped, tag = 'scoped memory for tpu_custom_call.1']
    #allocation6 [shape = 'u8[8192]{0}', space=vmem, size = 0x2000, scoped, tag = 'input window, operand 1']
    #allocation7 [shape = 's32[2]{0}', space=sflag, size = 0x8, scoped, tag = 'scoped memory for tpu_custom_call.1']
    #allocation8 [shape = 'u8[8192]{0}', space=vmem, size = 0x2000, scoped, tag = 'input window, operand 2']
    #allocation9 [shape = 'u8[65536]{0}', space=vmem, size = 0x10000, scoped, tag = 'input window, operand 3']
    #allocation10 [shape = 's32[2]{0}', space=sflag, size = 0x8, scoped, tag = 'scoped memory for tpu_custom_call.1']
    #allocation11 [shape = 'u8[32768]{0}', space=vmem, size = 0x8000, scoped, tag = 'input window, operand 4']
    #allocation12 [shape = 'u8[8192]{0}', space=vmem, size = 0x2000, scoped, tag = 'output window, operand 0']
    #allocation13 [shape = 'u8[8192]{0}', space=vmem, size = 0x2000, scoped, tag = 'output window, operand 1']
    #allocation14 [shape = 's32[2]{0}', space=sflag, size = 0x8, scoped, tag = 'scoped memory for tpu_custom_call.1']
    %13 = vsyncpa [#allocation4], 0
    %14 = vsyncpa [#allocation7], 0
    %s15 = scalar_lea.sflag [#allocation7], 1
    %16 = vsyncpa %s15, 0
    %17 = vsyncpa [#allocation10], 0
    %s18 = scalar_lea.sflag [#allocation10], 1
    %19 = vsyncpa %s18, 0
    %20 = vsyncpa [#allocation5], 0
    %s21 = scalar_lea.sflag [#allocation5], 1
    %22 = vsyncpa %s21, 0
    %23 = vsyncpa [#allocation14], 0
    %s24 = scalar_lea.sflag [#allocation14], 1
    %25 = vsyncpa %s24, 0
    loop: start=0, step=1, limit=5
    $region2: #{tpu_custom_call.1} parent=1 // loop_pre_header
      _
    $region3: #{tpu_custom_call.1} parent=1 // loop_header
      %s27 = sphi 0, %s31
      %p28 = scmp.ge.s32.totalorder %s27, 5
      %s35 = sphi 0, %s35
      %s37 = sphi 0, %s35
      %s38 = sphi 0, %s37
      %s52 = sphi 0, %s38
      %s58 = sphi 0, %s60
      %s61 = sphi 0, %s58
      %s62 = sphi 0, %s61
      %s78 = sphi 0, %s62
      %s84 = sphi 0, %s86
      %s87 = sphi 0, %s84
      %s88 = sphi 0, %s87
      %s104 = sphi 0, %s88
      %s110 = sphi 0, %s112
      %s113 = sphi 0, %s110
      %s114 = sphi 0, %s113
      %s130 = sphi 0, %s114
      %s136 = sphi 0, %s138
      %s139 = sphi 0, %s136
      %s140 = sphi 0, %s139
      %s156 = sphi 0, %s140
      %s162 = sphi 0, %s164
      %s165 = sphi 0, %s162
      %s166 = sphi 0, %s165
      %s182 = sphi 0, %s166
      %s188 = sphi 0, %s190
      %s191 = sphi 0, %s188
      %s192 = sphi 0, %s191
      %s208 = sphi 0, %s192
      %s214 = sphi 0, %s216
      %s217 = sphi 0, %s214
      %s218 = sphi 0, %s217
      %s234 = sphi 0, %s218
    $region4: #{tpu_custom_call.1} parent=1 // loop_header_branch
      %30 = sbr.rel (%p28) target = $region8
    $region5: #{tpu_custom_call.1} parent=1 // loop_body
      %s32 = ssub.s32 %s27, 1
      %s33 = ssub.s32 %s27, 2
      %s34 = sadd.s32 %s27, 1
      %s36 = sadd.s32 %s35, 1
      %p39 = scmp.eq.s32.totalorder %s27, 2
      %p40 = scmp.ne.s32.totalorder %s35, %s37
      %p41 = scmp.eq.s32.totalorder %s27, 0
      %p42 = por %p40, %p41
      %p43 = scmp.ne.s32.totalorder %s35, %s37
      %p44 = scmp.eq.s32.totalorder %s32, 2
      %p45 = por %p43, %p44
      %p46 = scmp.ne.s32.totalorder %s37, %s38
      %p47 = scmp.eq.s32.totalorder %s32, 0
      %p48 = por %p46, %p47
      %p49 = scmp.ne.s32.totalorder %s37, %s38
      %p50 = scmp.eq.s32.totalorder %s33, 2
      %p51 = por %p49, %p50
      %p53 = scmp.ne.s32.totalorder %s38, %s52
      %p54 = scmp.eq.s32.totalorder %s33, 0
      %p55 = por %p53, %p54
      %s56 = ssub.s32 %s27, %s34
      %p57 = scmp.eq.s32.totalorder %s56, 0
      %s59 = sadd.s32 %s58, 1
      %s60 = scalar_select %p57, %s58, %s59
      %p63 = pneg %p57
      %p64 = scmp.eq.s32.totalorder %s27, 2
      %p65 = por %p63, %p64
      %p66 = scmp.ne.s32.totalorder %s58, %s61
      %p67 = scmp.eq.s32.totalorder %s27, 0
      %p68 = por %p66, %p67
      %p69 = scmp.ne.s32.totalorder %s58, %s61
      %p70 = scmp.eq.s32.totalorder %s32, 2
      %p71 = por %p69, %p70
      %p72 = scmp.ne.s32.totalorder %s61, %s62
      %p73 = scmp.eq.s32.totalorder %s32, 0
      %p74 = por %p72, %p73
      %p75 = scmp.ne.s32.totalorder %s61, %s62
      %p76 = scmp.eq.s32.totalorder %s33, 2
      %p77 = por %p75, %p76
      %p79 = scmp.ne.s32.totalorder %s62, %s78
      %p80 = scmp.eq.s32.totalorder %s33, 0
      %p81 = por %p79, %p80
      %s82 = ssub.s32 %s27, %s34
      %p83 = scmp.eq.s32.totalorder %s82, 0
      %s85 = sadd.s32 %s84, 1
      %s86 = scalar_select %p83, %s84, %s85
      %p89 = pneg %p83
      %p90 = scmp.eq.s32.totalorder %s27, 2
      %p91 = por %p89, %p90
      %p92 = scmp.ne.s32.totalorder %s84, %s87
      %p93 = scmp.eq.s32.totalorder %s27, 0
      %p94 = por %p92, %p93
      %p95 = scmp.ne.s32.totalorder %s84, %s87
      %p96 = scmp.eq.s32.totalorder %s32, 2
      %p97 = por %p95, %p96
      %p98 = scmp.ne.s32.totalorder %s87, %s88
      %p99 = scmp.eq.s32.totalorder %s32, 0
      %p100 = por %p98, %p99
      %p101 = scmp.ne.s32.totalorder %s87, %s88
      %p102 = scmp.eq.s32.totalorder %s33, 2
      %p103 = por %p101, %p102
      %p105 = scmp.ne.s32.totalorder %s88, %s104
      %p106 = scmp.eq.s32.totalorder %s33, 0
      %p107 = por %p105, %p106
      %s108 = ssub.s32 %s27, %s34
      %p109 = scmp.eq.s32.totalorder %s108, 0
      %s111 = sadd.s32 %s110, 1
      %s112 = scalar_select %p109, %s110, %s111
      %p115 = pneg %p109
      %p116 = scmp.eq.s32.totalorder %s27, 2
      %p117 = por %p115, %p116
      %p118 = scmp.ne.s32.totalorder %s110, %s113
      %p119 = scmp.eq.s32.totalorder %s27, 0
      %p120 = por %p118, %p119
      %p121 = scmp.ne.s32.totalorder %s110, %s113
      %p122 = scmp.eq.s32.totalorder %s32, 2
      %p123 = por %p121, %p122
      %p124 = scmp.ne.s32.totalorder %s113, %s114
      %p125 = scmp.eq.s32.totalorder %s32, 0
      %p126 = por %p124, %p125
      %p127 = scmp.ne.s32.totalorder %s113, %s114
      %p128 = scmp.eq.s32.totalorder %s33, 2
      %p129 = por %p127, %p128
      %p131 = scmp.ne.s32.totalorder %s114, %s130
      %p132 = scmp.eq.s32.totalorder %s33, 0
      %p133 = por %p131, %p132
      %s134 = ssub.s32 %s27, %s34
      %p135 = scmp.eq.s32.totalorder %s134, 0
      %s137 = sadd.s32 %s136, 1
      %s138 = scalar_select %p135, %s136, %s137
      %p141 = pneg %p135
      %p142 = scmp.eq.s32.totalorder %s27, 2
      %p143 = por %p141, %p142
      %p144 = scmp.ne.s32.totalorder %s136, %s139
      %p145 = scmp.eq.s32.totalorder %s27, 0
      %p146 = por %p144, %p145
      %p147 = scmp.ne.s32.totalorder %s136, %s139
      %p148 = scmp.eq.s32.totalorder %s32, 2
      %p149 = por %p147, %p148
      %p150 = scmp.ne.s32.totalorder %s139, %s140
      %p151 = scmp.eq.s32.totalorder %s32, 0
      %p152 = por %p150, %p151
      %p153 = scmp.ne.s32.totalorder %s139, %s140
      %p154 = scmp.eq.s32.totalorder %s33, 2
      %p155 = por %p153, %p154
      %p157 = scmp.ne.s32.totalorder %s140, %s156
      %p158 = scmp.eq.s32.totalorder %s33, 0
      %p159 = por %p157, %p158
      %s160 = ssub.s32 %s27, %s34
      %p161 = scmp.eq.s32.totalorder %s160, 0
      %s163 = sadd.s32 %s162, 1
      %s164 = scalar_select %p161, %s162, %s163
      %p167 = pneg %p161
      %p168 = scmp.eq.s32.totalorder %s27, 2
      %p169 = por %p167, %p168
      %p170 = scmp.ne.s32.totalorder %s162, %s165
      %p171 = scmp.eq.s32.totalorder %s27, 0
      %p172 = por %p170, %p171
      %p173 = scmp.ne.s32.totalorder %s162, %s165
      %p174 = scmp.eq.s32.totalorder %s32, 2
      %p175 = por %p173, %p174
      %p176 = scmp.ne.s32.totalorder %s165, %s166
      %p177 = scmp.eq.s32.totalorder %s32, 0
      %p178 = por %p176, %p177
      %p179 = scmp.ne.s32.totalorder %s165, %s166
      %p180 = scmp.eq.s32.totalorder %s33, 2
      %p181 = por %p179, %p180
      %p183 = scmp.ne.s32.totalorder %s166, %s182
      %p184 = scmp.eq.s32.totalorder %s33, 0
      %p185 = por %p183, %p184
      %s186 = ssub.s32 %s27, %s34
      %p187 = scmp.eq.s32.totalorder %s186, 0
      %s189 = sadd.s32 %s188, 1
      %s190 = scalar_select %p187, %s188, %s189
      %p193 = pneg %p187
      %p194 = scmp.eq.s32.totalorder %s27, 2
      %p195 = por %p193, %p194
      %p196 = scmp.ne.s32.totalorder %s188, %s191
      %p197 = scmp.eq.s32.totalorder %s27, 0
      %p198 = por %p196, %p197
      %p199 = scmp.ne.s32.totalorder %s188, %s191
      %p200 = scmp.eq.s32.totalorder %s32, 2
      %p201 = por %p199, %p200
      %p202 = scmp.ne.s32.totalorder %s191, %s192
      %p203 = scmp.eq.s32.totalorder %s32, 0
      %p204 = por %p202, %p203
      %p205 = scmp.ne.s32.totalorder %s191, %s192
      %p206 = scmp.eq.s32.totalorder %s33, 2
      %p207 = por %p205, %p206
      %p209 = scmp.ne.s32.totalorder %s192, %s208
      %p210 = scmp.eq.s32.totalorder %s33, 0
      %p211 = por %p209, %p210
      %s212 = ssub.s32 %s27, %s34
      %p213 = scmp.eq.s32.totalorder %s212, 0
      %s215 = sadd.s32 %s214, 1
      %s216 = scalar_select %p213, %s214, %s215
      %p219 = pneg %p213
      %p220 = scmp.eq.s32.totalorder %s27, 2
      %p221 = por %p219, %p220
      %p222 = scmp.ne.s32.totalorder %s214, %s217
      %p223 = scmp.eq.s32.totalorder %s27, 0
      %p224 = por %p222, %p223
      %p225 = scmp.ne.s32.totalorder %s214, %s217
      %p226 = scmp.eq.s32.totalorder %s32, 2
      %p227 = por %p225, %p226
      %p228 = scmp.ne.s32.totalorder %s217, %s218
      %p229 = scmp.eq.s32.totalorder %s32, 0
      %p230 = por %p228, %p229
      %p231 = scmp.ne.s32.totalorder %s217, %s218
      %p232 = scmp.eq.s32.totalorder %s33, 2
      %p233 = por %p231, %p232
      %p235 = scmp.ne.s32.totalorder %s218, %s234
      %p236 = scmp.eq.s32.totalorder %s33, 0
      %p237 = por %p235, %p236
      %p238 = scmp.le.s32.totalorder 1, %s27
      %p239 = scmp.lt.s32.totalorder %s27, 4
      %p240 = pnand %p238, %p239
      %p241 = pneg %p240
      // Predicated region
      $region9: #{tpu_custom_call.1} parent=5 // pred_check
        _
      $region10: #{tpu_custom_call.1} parent=5 // pred_check_branch
        %243 = sbr.rel (%p240) target = $region12
      $region11: #{tpu_custom_call.1} parent=5 // pred_region
        %s244 = ssub.s32 %s27, 1
        // Predicated region
        $region13: #{tpu_custom_call.1} parent=11 // pred_check
          %p245 = pneg %p48
        $region14: #{tpu_custom_call.1} parent=11 // pred_check_branch
          %247 = sbr.rel (%p245) target = $region16
        $region15: #{tpu_custom_call.1} parent=11 // pred_region
          %s249 = ssub.s32 128, 128
          %250 = vsyncadd [#allocation4], %s249
          %s252 = sshll.u32 [#allocation3], 4
          %s253 = int_to_ptr.vmem [resolvable:$true] %s252
          %255 = dma.hbm_to_vmem [thread:$0]  %s0, 128, %s253, [#allocation4]
        $region16: #{tpu_custom_call.1} parent=11 // pred_fallthru
          _
      $region12: #{tpu_custom_call.1} parent=5 // pred_fallthru
        _
      %p256 = scmp.lt.s32.totalorder %s27, 3
      // Predicated region
      $region17: #{tpu_custom_call.1} parent=5 // pred_check
        %p257 = pneg %p256
      $region18: #{tpu_custom_call.1} parent=5 // pred_check_branch
        %259 = sbr.rel (%p257) target = $region20
      $region19: #{tpu_custom_call.1} parent=5 // pred_region
        // Predicated region
        $region21: #{tpu_custom_call.1} parent=19 // pred_check
          %p260 = pneg %p68
        $region22: #{tpu_custom_call.1} parent=19 // pred_check_branch
          %262 = sbr.rel (%p260) target = $region24
        $region23: #{tpu_custom_call.1} parent=19 // pred_region
          %s263 = sand.u32 %s27, 1
          %s264 = scalar_lea.sflag [#allocation7], %s263
          %s265 = sand.u32 %s58, 1
          %s266 = smul.addr %s265, 8
          %s267 = scalar_lea.vmem [#allocation6], %s266
          %s269 = ssub.s32 128, 128
          %270 = vsyncadd %s264, %s269
          %s271 = smul.addr %s27, 128
          %s272 = scalar_lea.hbm %s1, %s271
          %s274 = sshll.u32 %s267, 4
          %s275 = int_to_ptr.vmem [resolvable:$true] %s274
          %277 = dma.hbm_to_vmem [thread:$0]  %s272, 128, %s275, %s264
        $region24: #{tpu_custom_call.1} parent=19 // pred_fallthru
          _
        // Predicated region
        $region25: #{tpu_custom_call.1} parent=19 // pred_check
          %p278 = pneg %p94
        $region26: #{tpu_custom_call.1} parent=19 // pred_check_branch
          %280 = sbr.rel (%p278) target = $region28
        $region27: #{tpu_custom_call.1} parent=19 // pred_region
          %s281 = sand.u32 %s27, 1
          %s282 = scalar_lea.sflag [#allocation7], %s281
          %s283 = sand.u32 %s84, 1
          %s284 = smul.addr %s283, 8
          %s285 = scalar_lea.vmem [#allocation8], %s284
          %s287 = ssub.s32 128, 128
          %288 = vsyncadd %s282, %s287
          %s289 = smul.addr %s27, 128
          %s290 = scalar_lea.hbm %s2, %s289
          %s292 = sshll.u32 %s285, 4
          %s293 = int_to_ptr.vmem [resolvable:$true] %s292
          %295 = dma.hbm_to_vmem [thread:$0]  %s290, 128, %s293, %s282
        $region28: #{tpu_custom_call.1} parent=19 // pred_fallthru
          _
        // Predicated region
        $region29: #{tpu_custom_call.1} parent=19 // pred_check
          %p296 = pneg %p120
        $region30: #{tpu_custom_call.1} parent=19 // pred_check_branch
          %298 = sbr.rel (%p296) target = $region32
        $region31: #{tpu_custom_call.1} parent=19 // pred_region
          %s299 = sand.u32 %s27, 1
          %s300 = scalar_lea.sflag [#allocation10], %s299
          %s301 = sand.u32 %s110, 1
          %s302 = smul.addr %s301, 64
          %s303 = scalar_lea.vmem [#allocation9], %s302
          %s305 = ssub.s32 1024, 1024
          %306 = vsyncadd %s300, %s305
          %s307 = smul.addr %s27, 8
          %s308 = smul.addr %s307, 128
          %s309 = scalar_lea.hbm %s3, %s308
          %s310 = sshll.u32 %s303, 4
          %s311 = int_to_ptr.vmem [resolvable:$true] %s310
          %316 = dma.hbm_to_vmem [thread:$0]  %s309, 1024, %s311, %s300, 128, 128, 8
        $region32: #{tpu_custom_call.1} parent=19 // pred_fallthru
          _
        // Predicated region
        $region33: #{tpu_custom_call.1} parent=19 // pred_check
          %p317 = pneg %p146
        $region34: #{tpu_custom_call.1} parent=19 // pred_check_branch
          %319 = sbr.rel (%p317) target = $region36
        $region35: #{tpu_custom_call.1} parent=19 // pred_region
          %s320 = sand.u32 %s27, 1
          %s321 = scalar_lea.sflag [#allocation10], %s320
          %s322 = sand.u32 %s136, 1
          %s323 = smul.addr %s322, 32
          %s324 = scalar_lea.vmem [#allocation11], %s323
          %s326 = ssub.s32 512, 512
          %327 = vsyncadd %s321, %s326
          %s328 = smul.addr %s27, 4
          %s329 = smul.addr %s328, 128
          %s330 = scalar_lea.hbm %s4, %s329
          %s331 = sshll.u32 %s324, 4
          %s332 = int_to_ptr.vmem [resolvable:$true] %s331
          %337 = dma.hbm_to_vmem [thread:$0]  %s330, 512, %s332, %s321, 128, 128, 8
        $region36: #{tpu_custom_call.1} parent=19 // pred_fallthru
          _
        // Predicated region
        $region37: #{tpu_custom_call.1} parent=19 // pred_check
          %p338 = pneg %p172
        $region38: #{tpu_custom_call.1} parent=19 // pred_check_branch
          %340 = sbr.rel (%p338) target = $region40
        $region39: #{tpu_custom_call.1} parent=19 // pred_region
          %p341 = scmp.lt.s32.totalorder %s27, 2
          %s342 = scalar_select %p341, %s27, 2
          %s343 = scalar_lea.vmem %s5, %s342
        $region40: #{tpu_custom_call.1} parent=19 // pred_fallthru
          _
      $region20: #{tpu_custom_call.1} parent=5 // pred_fallthru
        _
      %p344 = scmp.le.s32.totalorder 1, %s27
      %p345 = scmp.lt.s32.totalorder %s27, 4
      %p346 = pnand %p344, %p345
      %p347 = pneg %p346
      // Predicated region
      $region41: #{tpu_custom_call.1} parent=5 // pred_check
        _
      $region42: #{tpu_custom_call.1} parent=5 // pred_check_branch
        %349 = sbr.rel (%p346) target = $region44
      $region43: #{tpu_custom_call.1} parent=5 // pred_region
        %s350 = ssub.s32 %s27, 1
        // Predicated region
        $region45: #{tpu_custom_call.1} parent=43 // pred_check
          %p351 = pneg %p48
        $region46: #{tpu_custom_call.1} parent=43 // pred_check_branch
          %353 = sbr.rel (%p351) target = $region48
        $region47: #{tpu_custom_call.1} parent=43 // pred_region
          %354 = dma.done [#allocation4], 128
        $region48: #{tpu_custom_call.1} parent=43 // pred_fallthru
          _
        %s355 = sand.u32 %s32, 1
        %s356 = scalar_lea.sflag [#allocation7], %s355
        %s357 = sand.u32 %s61, 1
        %s358 = smul.addr %s357, 8
        %s359 = scalar_lea.vmem [#allocation6], %s358
        // Predicated region
        $region49: #{tpu_custom_call.1} parent=43 // pred_check
          %p360 = pneg %p74
        $region50: #{tpu_custom_call.1} parent=43 // pred_check_branch
          %362 = sbr.rel (%p360) target = $region52
        $region51: #{tpu_custom_call.1} parent=43 // pred_region
          %363 = dma.done %s356, 128
        $region52: #{tpu_custom_call.1} parent=43 // pred_fallthru
          _
        %s364 = sand.u32 %s32, 1
        %s365 = scalar_lea.sflag [#allocation7], %s364
        %s366 = sand.u32 %s87, 1
        %s367 = smul.addr %s366, 8
        %s368 = scalar_lea.vmem [#allocation8], %s367
        // Predicated region
        $region53: #{tpu_custom_call.1} parent=43 // pred_check
          %p369 = pneg %p100
        $region54: #{tpu_custom_call.1} parent=43 // pred_check_branch
          %371 = sbr.rel (%p369) target = $region56
        $region55: #{tpu_custom_call.1} parent=43 // pred_region
          %372 = dma.done %s365, 128
        $region56: #{tpu_custom_call.1} parent=43 // pred_fallthru
          _
        %s373 = sand.u32 %s32, 1
        %s374 = scalar_lea.sflag [#allocation10], %s373
        %s375 = sand.u32 %s113, 1
        %s376 = smul.addr %s375, 64
        %s377 = scalar_lea.vmem [#allocation9], %s376
        // Predicated region
        $region57: #{tpu_custom_call.1} parent=43 // pred_check
          %p378 = pneg %p126
        $region58: #{tpu_custom_call.1} parent=43 // pred_check_branch
          %380 = sbr.rel (%p378) target = $region60
        $region59: #{tpu_custom_call.1} parent=43 // pred_region
          %381 = dma.done %s374, 1024
        $region60: #{tpu_custom_call.1} parent=43 // pred_fallthru
          _
        %s382 = sand.u32 %s32, 1
        %s383 = scalar_lea.sflag [#allocation10], %s382
        %s384 = sand.u32 %s139, 1
        %s385 = smul.addr %s384, 32
        %s386 = scalar_lea.vmem [#allocation11], %s385
        // Predicated region
        $region61: #{tpu_custom_call.1} parent=43 // pred_check
          %p387 = pneg %p152
        $region62: #{tpu_custom_call.1} parent=43 // pred_check_branch
          %389 = sbr.rel (%p387) target = $region64
        $region63: #{tpu_custom_call.1} parent=43 // pred_region
          %390 = dma.done %s383, 512
        $region64: #{tpu_custom_call.1} parent=43 // pred_fallthru
          _
        %p391 = pneg %p48
        %p392 = pneg %p45
        %s393 = sand.u32 %s32, 1
        %s394 = scalar_lea.sflag [#allocation7], %s393
        %s395 = sand.u32 %s61, 1
        %s396 = smul.addr %s395, 8
        %s397 = scalar_lea.vmem [#allocation6], %s396
        %p398 = pneg %p74
        %p399 = pneg %p71
        %s400 = sand.u32 %s32, 1
        %s401 = scalar_lea.sflag [#allocation7], %s400
        %s402 = sand.u32 %s87, 1
        %s403 = smul.addr %s402, 8
        %s404 = scalar_lea.vmem [#allocation8], %s403
        %p405 = pneg %p100
        %p406 = pneg %p97
        %s407 = sand.u32 %s32, 1
        %s408 = scalar_lea.sflag [#allocation10], %s407
        %s409 = sand.u32 %s113, 1
        %s410 = smul.addr %s409, 64
        %s411 = scalar_lea.vmem [#allocation9], %s410
        %p412 = pneg %p126
        %p413 = pneg %p123
        %s414 = sand.u32 %s32, 1
        %s415 = scalar_lea.sflag [#allocation10], %s414
        %s416 = sand.u32 %s139, 1
        %s417 = smul.addr %s416, 32
        %s418 = scalar_lea.vmem [#allocation11], %s417
        %p419 = pneg %p152
        %p420 = pneg %p149
        %p421 = scmp.lt.s32.totalorder %s32, 2
        %s422 = scalar_select %p421, %s32, 2
        %s423 = scalar_lea.vmem %s5, %s422
        %p424 = pneg %p178
        %p425 = pneg %p175
        %p426 = pneg %p204
        %p427 = pneg %p201
        %s428 = sand.u32 %s191, 1
        %s429 = scalar_lea.sflag [#allocation5], %s428
        %s430 = sand.u32 %s191, 1
        %s431 = smul.addr %s430, 8
        %s432 = scalar_lea.vmem [#allocation12], %s431
        %p433 = pneg %p230
        %p434 = pneg %p227
        %s435 = sand.u32 %s217, 1
        %s436 = scalar_lea.sflag [#allocation14], %s435
        %s437 = sand.u32 %s217, 1
        %s438 = smul.addr %s437, 8
        %s439 = scalar_lea.vmem [#allocation13], %s438
        %p440 = scmp.lt.s32.totalorder %s32, 2
        %s441 = scalar_select %p440, %s32, 2
        %s442 = scalar_lea.vmem %s5, %s441
        %p443 = scmp.eq.s32.totalorder %s32, 0
        // Predicated region
        $region65: #{tpu_custom_call.1} parent=43 // pred_check
          %p444 = pneg %p443
        $region66: #{tpu_custom_call.1} parent=43 // pred_check_branch
          %446 = sbr.rel (%p444) target = $region68
        $region67: #{tpu_custom_call.1} parent=43 // pred_region
          %v447 = vld [vmem:[#allocation3] sm:$0xff]
          %vm448 = vcmask 523264
          %449 = vst.msk [vmem:[#allocation2] sm:$0xff] %vm448, %v447
        $region68: #{tpu_custom_call.1} parent=43 // pred_fallthru
          _
        %v450 = vld [vmem:[#allocation2] sm:$0xff]
        %v451 = vld [vmem:[%s359] sm:$0xff]
        %v452 = vld [vmem:[%s368] sm:$0xff]
        %v453 = vld [vmem:[%s377] sm:$0xff]
        %v454 = vld [vmem:[%s377 + $0x8] sm:$0xff]
        %v455 = vld [vmem:[%s377 + $0x10] sm:$0xff]
        %v456 = vld [vmem:[%s377 + $0x18] sm:$0xff]
        %v457 = vld [vmem:[%s377 + $0x20] sm:$0xff]
        %v458 = vld [vmem:[%s377 + $0x28] sm:$0xff]
        %v459 = vld [vmem:[%s377 + $0x30] sm:$0xff]
        %v460 = vld [vmem:[%s377 + $0x38] sm:$0xff]
        %v461 = vld [vmem:[%s386] sm:$0xff]
        %v462 = vld [vmem:[%s386 + $0x8] sm:$0xff]
        %v463 = vld [vmem:[%s386 + $0x10] sm:$0xff]
        %v464 = vld [vmem:[%s386 + $0x18] sm:$0xff]
        %vm465 = vcmask 261120
        %v467 = vsel %vm465, %v451, 0
        %469 = vmatprep.subr.mxu0 0.0
        %470 = vmatpush1.msra.mxu0 0.0
        %471 = vmatprep.subr.mxu0 0.0
        %472 = vmatpush1.msra.mxu0 0.0
        %473 = vmatprep.subr.mxu0 0.0
        %474 = vmatpush1.msra.mxu0 0.0
        %475 = vmatprep.subr.mxu0 0.0
        %476 = vmatpush1.msra.mxu0 0.0
        %477 = vmatprep.subr.mxu0 0.0
        %478 = vmatpush1.msra.mxu0 0.0
        %479 = vmatprep.subr.mxu0 0.0
        %480 = vmatpush1.msra.mxu0 0.0
        %481 = vmatprep.subr.mxu0 0.0
        %482 = vmatpush1.msra.mxu0 0.0
        %483 = vmatprep.subr.mxu0 0.0
        %484 = vmatpush1.msra.mxu0 0.0
        %485 = vmatprep.subr.mxu0 0.0
        %486 = vmatpush1.msra.mxu0 0.0
        %487 = vmatprep.subr.mxu0 0.0
        %488 = vmatpush1.msra.mxu0 0.0
        %489 = vmatprep.subr.mxu0 0.0
        %490 = vmatpush1.msra.mxu0 0.0
        %491 = vmatprep.subr.mxu0 0.0
        %492 = vmatpush1.msra.mxu0 0.0
        %493 = vmatprep.subr.mxu0 0.0
        %494 = vmatpush1.msra.mxu0 %v464
        %495 = vmatprep.subr.mxu0 0.0
        %496 = vmatpush1.msra.mxu0 %v463
        %497 = vmatprep.subr.mxu0 0.0
        %498 = vmatpush1.msra.mxu0 %v462
        %499 = vmatprep.subr.mxu0 0.0
        %500 = vmatpush1.msra.mxu0 %v461
        %501 = vmatprep.subr.mxu0 0.0
        %502 = vmatpush2.msra.mxu0 0.0
        %503 = vmatprep.subr.mxu0 0.0
        %504 = vmatpush2.msra.mxu0 0.0
        %505 = vmatprep.subr.mxu0 0.0
        %506 = vmatpush2.msra.mxu0 0.0
        %507 = vmatprep.subr.mxu0 0.0
        %508 = vmatpush2.msra.mxu0 0.0
        %509 = vmatprep.subr.mxu0 0.0
        %510 = vmatpush2.msra.mxu0 0.0
        %511 = vmatprep.subr.mxu0 0.0
        %512 = vmatpush2.msra.mxu0 0.0
        %513 = vmatprep.subr.mxu0 0.0
        %514 = vmatpush2.msra.mxu0 0.0
        %515 = vmatprep.subr.mxu0 0.0
        %516 = vmatpush2.msra.mxu0 0.0
        %517 = vmatprep.subr.mxu0 0.0
        %518 = vmatpush2.msra.mxu0 0.0
        %519 = vmatprep.subr.mxu0 0.0
        %520 = vmatpush2.msra.mxu0 0.0
        %521 = vmatprep.subr.mxu0 0.0
        %522 = vmatpush2.msra.mxu0 0.0
        %523 = vmatprep.subr.mxu0 0.0
        %524 = vmatpush2.msra.mxu0 0.0
        %525 = vmatprep.subr.mxu0 0.0
        %526 = vmatpush2.msra.mxu0 0.0
        %527 = vmatprep.subr.mxu0 0.0
        %528 = vmatpush2.msra.mxu0 0.0
        %529 = vmatprep.subr.mxu0 0.0
        %530 = vmatpush2.msra.mxu0 0.0
        %531 = vmatprep.subr.mxu0 0.0
        %532 = vmatpush2.msra.mxu0 0.0
        %533 = vmatprep.mubr.f32.mxu0 0.0
        %534 = vmatmul.mubr.f32.gmra.mxu0 %v467
        %v535 = vpop.f32.mrf.mxu0
        %v536 = vadd.f32 0.0, %v535
        %v537 = vpop.f32.mrf.mxu0
        %538 = vdwg.mxu0
        %vm539 = vcmask 523264
        %v541 = vsel %vm539, %v450, 0
        %543 = vmatprep.subr.mxu0 0.0
        %544 = vmatpush1.msra.mxu0 0.0
        %545 = vmatprep.subr.mxu0 0.0
        %546 = vmatpush1.msra.mxu0 0.0
        %547 = vmatprep.subr.mxu0 0.0
        %548 = vmatpush1.msra.mxu0 0.0
        %549 = vmatprep.subr.mxu0 0.0
        %550 = vmatpush1.msra.mxu0 0.0
        %551 = vmatprep.subr.mxu0 0.0
        %552 = vmatpush1.msra.mxu0 0.0
        %553 = vmatprep.subr.mxu0 0.0
        %554 = vmatpush1.msra.mxu0 0.0
        %555 = vmatprep.subr.mxu0 0.0
        %556 = vmatpush1.msra.mxu0 0.0
        %557 = vmatprep.subr.mxu0 0.0
        %558 = vmatpush1.msra.mxu0 0.0
        %559 = vmatprep.subr.mxu0 0.0
        %560 = vmatpush1.msra.mxu0 %v460
        %561 = vmatprep.subr.mxu0 0.0
        %562 = vmatpush1.msra.mxu0 %v459
        %563 = vmatprep.subr.mxu0 0.0
        %564 = vmatpush1.msra.mxu0 %v458
        %565 = vmatprep.subr.mxu0 0.0
        %566 = vmatpush1.msra.mxu0 %v457
        %567 = vmatprep.subr.mxu0 0.0
        %568 = vmatpush1.msra.mxu0 %v456
        %569 = vmatprep.subr.mxu0 0.0
        %570 = vmatpush1.msra.mxu0 %v455
        %571 = vmatprep.subr.mxu0 0.0
        %572 = vmatpush1.msra.mxu0 %v454
        %573 = vmatprep.subr.mxu0 0.0
        %574 = vmatpush1.msra.mxu0 %v453
        %575 = vmatprep.subr.mxu0 0.0
        %576 = vmatpush2.msra.mxu0 0.0
        %577 = vmatprep.subr.mxu0 0.0
        %578 = vmatpush2.msra.mxu0 0.0
        %579 = vmatprep.subr.mxu0 0.0
        %580 = vmatpush2.msra.mxu0 0.0
        %581 = vmatprep.subr.mxu0 0.0
        %582 = vmatpush2.msra.mxu0 0.0
        %583 = vmatprep.subr.mxu0 0.0
        %584 = vmatpush2.msra.mxu0 0.0
        %585 = vmatprep.subr.mxu0 0.0
        %586 = vmatpush2.msra.mxu0 0.0
        %587 = vmatprep.subr.mxu0 0.0
        %588 = vmatpush2.msra.mxu0 0.0
        %589 = vmatprep.subr.mxu0 0.0
        %590 = vmatpush2.msra.mxu0 0.0
        %591 = vmatprep.subr.mxu0 0.0
        %592 = vmatpush2.msra.mxu0 0.0
        %593 = vmatprep.subr.mxu0 0.0
        %594 = vmatpush2.msra.mxu0 0.0
        %595 = vmatprep.subr.mxu0 0.0
        %596 = vmatpush2.msra.mxu0 0.0
        %597 = vmatprep.subr.mxu0 0.0
        %598 = vmatpush2.msra.mxu0 0.0
        %599 = vmatprep.subr.mxu0 0.0
        %600 = vmatpush2.msra.mxu0 0.0
        %601 = vmatprep.subr.mxu0 0.0
        %602 = vmatpush2.msra.mxu0 0.0
        %603 = vmatprep.subr.mxu0 0.0
        %604 = vmatpush2.msra.mxu0 0.0
        %605 = vmatprep.subr.mxu0 0.0
        %606 = vmatpush2.msra.mxu0 0.0
        %607 = vmatprep.mubr.f32.mxu0 0.0
        %608 = vmatmul.mubr.f32.gmra.mxu0 %v541
        %v609 = vpop.f32.mrf.mxu0
        %v610 = vadd.f32 %v536, %v609
        %v611 = vpop.f32.mrf.mxu0
        %612 = vdwg.mxu0
        %v613 = vld [vmem:[%s442] sm:$0x1]
        %v615 = vlaneseq
        %v616 = vshrl.u32 %v615, 7
        %v617 = vsub.s32 0, %v616
        %v618 = vrot.slane %v613, %v617
        %v620 = vadd.f32 %v610, %v618
        %v621 = vxor.u32 %v620, 2147483648
        %v622 = vmul.f32 %v621, 1.442695
        %v623 = vpow.pop %v622
        %v624 = vadd.f32 %v623, 1.0
        %v625 = vrcp.pop %v624
        %v626 = vmul.f32 1.0, %v625
        %v627 = vtanh.pop %v620
        %629 = vrot.lane.b32.xlu0 %v452, 32
        %v630 = vpop.permute.xlu0 %629
        %v632 = vmul.f32 %v626, %v630
        %634 = vrot.lane.b32.xlu0 %v627, 64
        %v635 = vpop.permute.xlu0 %634
        %v637 = vmul.f32 %v626, %v635
        %639 = vrot.lane.b32.xlu0 %v637, 32
        %v640 = vpop.permute.xlu0 %639
        %v642 = vadd.f32 %v632, %v640
        %v643 = vtanh.pop %v642
        %645 = vrot.lane.b32.xlu0 %v643, 64
        %v646 = vpop.permute.xlu0 %645
        %v648 = vmul.f32 %v626, %v646
        %650 = vrot.lane.b32.xlu0 %v648, 32
        %v651 = vpop.permute.xlu0 %650
        %653 = vst.msk [vmem:[%s432] sm:$0xff] %vm465, %v651
        %655 = vrot.lane.b32.xlu0 %v642, 96
        %v656 = vpop.permute.xlu0 %655
        %658 = vst.msk [vmem:[%s439] sm:$0xff] %vm465, %v656
        %s659 = sadd.s32 %s32, 1
        %p660 = scmp.lt.s32.totalorder %s659, 3
        // Predicated region
        $region69: #{tpu_custom_call.1} parent=43 // pred_check
          %p661 = pneg %p660
        $region70: #{tpu_custom_call.1} parent=43 // pred_check_branch
          %663 = sbr.rel (%p661) target = $region72
        $region71: #{tpu_custom_call.1} parent=43 // pred_region
          %664 = vst.msk [vmem:[#allocation2] sm:$0xff] %vm465, %v651
        $region72: #{tpu_custom_call.1} parent=43 // pred_fallthru
          _
        %s665 = sand.u32 %s191, 1
        %s666 = scalar_lea.sflag [#allocation5], %s665
        %s667 = sand.u32 %s191, 1
        %s668 = smul.addr %s667, 8
        %s669 = scalar_lea.vmem [#allocation12], %s668
        %s670 = sand.u32 %s217, 1
        %s671 = scalar_lea.sflag [#allocation14], %s670
        %s672 = sand.u32 %s217, 1
        %s673 = smul.addr %s672, 8
        %s674 = scalar_lea.vmem [#allocation13], %s673
        // Predicated region
        $region73: #{tpu_custom_call.1} parent=43 // pred_check
          %p675 = pneg %p201
        $region74: #{tpu_custom_call.1} parent=43 // pred_check_branch
          %677 = sbr.rel (%p675) target = $region76
        $region75: #{tpu_custom_call.1} parent=43 // pred_region
          %s679 = ssub.s32 128, 128
          %680 = vsyncadd %s666, %s679
          %s681 = smul.addr %s32, 128
          %s682 = scalar_lea.hbm %s6, %s681
          %s684 = sshll.u32 %s669, 4
          %s685 = int_to_ptr.vmem [resolvable:$true] %s684
          %687 = dma.vmem_to_hbm [thread:$0]  %s685, 128, %s682, %s666
        $region76: #{tpu_custom_call.1} parent=43 // pred_fallthru
          _
        // Predicated region
        $region77: #{tpu_custom_call.1} parent=43 // pred_check
          %p688 = pneg %p227
        $region78: #{tpu_custom_call.1} parent=43 // pred_check_branch
          %690 = sbr.rel (%p688) target = $region80
        $region79: #{tpu_custom_call.1} parent=43 // pred_region
          %s692 = ssub.s32 128, 128
          %693 = vsyncadd %s671, %s692
          %s694 = smul.addr %s32, 128
          %s695 = scalar_lea.hbm %s7, %s694
          %s697 = sshll.u32 %s674, 4
          %s698 = int_to_ptr.vmem [resolvable:$true] %s697
          %700 = dma.vmem_to_hbm [thread:$0]  %s698, 128, %s695, %s671
        $region80: #{tpu_custom_call.1} parent=43 // pred_fallthru
          _
      $region44: #{tpu_custom_call.1} parent=5 // pred_fallthru
        _
      %p701 = scmp.le.s32.totalorder 2, %s27
      // Predicated region
      $region81: #{tpu_custom_call.1} parent=5 // pred_check
        %p702 = pneg %p701
      $region82: #{tpu_custom_call.1} parent=5 // pred_check_branch
        %704 = sbr.rel (%p702) target = $region84
      $region83: #{tpu_custom_call.1} parent=5 // pred_region
        %s705 = ssub.s32 %s27, 2
        // Predicated region
        $region85: #{tpu_custom_call.1} parent=83 // pred_check
          %p706 = pneg %p207
        $region86: #{tpu_custom_call.1} parent=83 // pred_check_branch
          %708 = sbr.rel (%p706) target = $region88
        $region87: #{tpu_custom_call.1} parent=83 // pred_region
          %s709 = sand.u32 %s192, 1
          %s710 = scalar_lea.sflag [#allocation5], %s709
          %s711 = sand.u32 %s192, 1
          %s712 = smul.addr %s711, 8
          %s713 = scalar_lea.vmem [#allocation12], %s712
          %714 = dma.done %s710, 128
        $region88: #{tpu_custom_call.1} parent=83 // pred_fallthru
          _
        // Predicated region
        $region89: #{tpu_custom_call.1} parent=83 // pred_check
          %p715 = pneg %p233
        $region90: #{tpu_custom_call.1} parent=83 // pred_check_branch
          %717 = sbr.rel (%p715) target = $region92
        $region91: #{tpu_custom_call.1} parent=83 // pred_region
          %s718 = sand.u32 %s218, 1
          %s719 = scalar_lea.sflag [#allocation14], %s718
          %s720 = sand.u32 %s218, 1
          %s721 = smul.addr %s720, 8
          %s722 = scalar_lea.vmem [#allocation13], %s721
          %723 = dma.done %s719, 128
        $region92: #{tpu_custom_call.1} parent=83 // pred_fallthru
          _
      $region84: #{tpu_custom_call.1} parent=5 // pred_fallthru
        _
    $region6: #{tpu_custom_call.1} parent=1 // loop_footer
      %s31 = sadd.s32 1, %s27
    $region7: #{tpu_custom_call.1} parent=1 // loop_footer_branch
      %26 = sbr.rel target = $region3
    $region8: #{tpu_custom_call.1} parent=1 // loop_exit
      _
    %724 = vsyncpa [#allocation4], 1
    %s725 = scalar_lea.sflag [#allocation4], 1
    %726 = vsyncpa %s725, 1
    %727 = vsyncpa [#allocation7], 1
    %s728 = scalar_lea.sflag [#allocation7], 1
    %729 = vsyncpa %s728, 1
    %730 = vsyncpa [#allocation10], 1
    %s731 = scalar_lea.sflag [#allocation10], 1
    %732 = vsyncpa %s731, 1
    %733 = vsyncpa [#allocation5], 1
    %s734 = scalar_lea.sflag [#allocation5], 1
    %735 = vsyncpa %s734, 1
    %736 = vsyncpa [#allocation14], 1
    %s737 = scalar_lea.sflag [#allocation14], 1
    %738 = vsyncpa %s737, 1

</llo_original>
